<compile_context>
chip_gen: v5e
topology: v5e:2x2
jax: 0.10.0
libtpu: 0.0.40
codegen_flags: <defaults>
</compile_context>

<pallas_src>
import functools
from typing import NamedTuple

import numpy as np
import jax
import jax.numpy as jnp
from jax import lax
from jax.experimental import pallas as pl
from jax.experimental.pallas import tpu as pltpu

KH = 4  # every conv in the module is 4x4


class Dims(NamedTuple):
    n: int
    c0: int
    h: int
    w: int
    c1: int
    oh1: int
    ow1: int
    c2: int
    oh2: int
    ow2: int


def _conv_out(size, k, s, p):
    return (size + 2 * p - k) // s + 1


# ----------------------------- Pallas kernel --------------------------------

def _disc_kernel(xpad_ref, pk_ref, o_ref, y1pad_ref, *, d: Dims):
    f32 = jnp.float32
    wc0 = d.w * d.c0
    ow1c1 = d.ow1 * d.c1
    ow2c2 = d.ow2 * d.c2
    hp = d.h + 2          # padded rows per sample (conv1 input)
    oh1p = d.oh1 + 2      # padded rows per sample (conv2 input)

    # Row offsets inside the packed constant slab.
    r_b1 = 0
    r_b2 = r_b1 + KH * wc0
    r_gamma = r_b2 + KH * ow1c1
    r_beta = r_gamma + 1
    r_w3 = r_beta + 1
    r_gsum = r_w3 + d.n * d.oh2

    b1 = pk_ref[pl.ds(r_b1, KH * wc0), 0:ow1c1]       # (KH*W*C0,   OW1*C1)
    b2 = pk_ref[pl.ds(r_b2, KH * ow1c1), 0:ow2c2]     # (KH*OW1*C1, OW2*C2)

    # ---- conv1 (k4 s2 p1) + LeakyReLU(0.2): strided-row gather -> ONE GEMM
    xg1 = jnp.concatenate(
        [jnp.concatenate(
            [xpad_ref[pl.ds(n * hp + kh, d.oh1, stride=2), :] for kh in range(KH)],
            axis=1)
         for n in range(d.n)],
        axis=0)                                       # (N*OH1, KH*W*C0)
    y1 = jnp.dot(xg1, b1, preferred_element_type=f32)  # (N*OH1, OW1*C1)
    y1 = jnp.where(y1 > 0, y1, 0.2 * y1)

    # ---- conv2 (k4 s2 p1): pad rows into VMEM scratch, gather, ONE GEMM
    y1pad_ref[...] = jnp.zeros(y1pad_ref.shape, f32)
    for n in range(d.n):
        y1pad_ref[pl.ds(n * oh1p + 1, d.oh1), :] = y1[n * d.oh1:(n + 1) * d.oh1, :]
    xg2 = jnp.concatenate(
        [jnp.concatenate(
            [y1pad_ref[pl.ds(n * oh1p + kh, d.oh2, stride=2), :] for kh in range(KH)],
            axis=1)
         for n in range(d.n)],
        axis=0)                                       # (N*OH2, KH*OW1*C1)
    y2 = jnp.dot(xg2, b2, preferred_element_type=f32)  # (N*OH2, OW2*C2)

    # ---- BatchNorm2d (training batch stats, two-pass) + LeakyReLU — VPU/XLU only
    inv_cnt = 1.0 / float(d.n * d.oh2 * d.ow2)
    colsum = jnp.sum(y2, axis=0, keepdims=True)       # (1, OW2*C2)
    s1 = colsum[:, 0:d.c2]
    for j in range(1, d.ow2):
        s1 = s1 + colsum[:, j * d.c2:(j + 1) * d.c2]
    mean = s1 * inv_cnt                               # (1, C2)
    mean_b = jnp.concatenate([mean] * d.ow2, axis=1)  # (1, OW2*C2)
    yc = y2 - mean_b
    colsq = jnp.sum(yc * yc, axis=0, keepdims=True)
    s2 = colsq[:, 0:d.c2]
    for j in range(1, d.ow2):
        s2 = s2 + colsq[:, j * d.c2:(j + 1) * d.c2]
    var = s2 * inv_cnt                                # (1, C2)
    gamma = pk_ref[pl.ds(r_gamma, 1), 0:d.c2]
    beta = pk_ref[pl.ds(r_beta, 1), 0:d.c2]
    scale = gamma * lax.rsqrt(var + 1e-5)             # (1, C2)
    scale_b = jnp.concatenate([scale] * d.ow2, axis=1)
    beta_b = jnp.concatenate([beta] * d.ow2, axis=1)
    y2 = yc * scale_b + beta_b
    y2 = jnp.where(y2 > 0, y2, 0.2 * y2)

    # ---- conv3 (k4 s1 p0: full map -> 1x1 per sample) + Sigmoid
    w3t = pk_ref[pl.ds(r_w3, d.n * d.oh2), 0:ow2c2]   # (N*OH2, OW2*C2)
    gsum = pk_ref[pl.ds(r_gsum, d.n), 0:d.n * d.oh2]  # (N, N*OH2) 0/1 row-group sum
    z = jnp.dot(gsum, y2 * w3t, preferred_element_type=f32)   # (N, OW2*C2)
    logits = jnp.sum(z, axis=1, keepdims=True)        # (N, 1)
    o_ref[...] = pl.reciprocal(1.0 + jnp.exp(-logits))


# ------------------- constant / weight-folding preparation ------------------

def _fold_col_weights(w_oihw, in_w, out_w, stride, pad):
    """(KH*in_w*IC, out_w*OC): width-tap selection folded with conv weights.

    Rows ordered (kh, w, c_in) to match the in-kernel lane-stacked gather;
    cols ordered (ow, c_out)."""
    oc, ic, kh, kw = w_oihw.shape
    sel = np.zeros((kw, in_w, out_w), np.float32)     # sel[kw, w, ow]
    for j in range(kw):
        for ow in range(out_w):
            wi = stride * ow + j - pad
            if 0 <= wi < in_w:
                sel[j, wi, ow] = 1.0
    b = jnp.einsum("jwv,oihj->hwivo", sel, w_oihw.astype(jnp.float32))
    return b.reshape(kh * in_w * ic, out_w * oc)


def prepare_params(params, batch, height, width):
    """Fold all weights/constants into ONE packed f32 slab (single DMA operand)."""
    w1, w2, w3, gamma, beta = params
    c0, c1, c2 = w1.shape[1], w1.shape[0], w2.shape[0]
    oh1, ow1 = _conv_out(height, 4, 2, 1), _conv_out(width, 4, 2, 1)
    oh2, ow2 = _conv_out(oh1, 4, 2, 1), _conv_out(ow1, 4, 2, 1)
    # conv3 (stride 1, pad 0) must consume the full oh2 x ow2 map -> 1x1 output.
    assert w3.shape == (1, c2, oh2, ow2), (w3.shape, oh2, ow2)

    b1 = _fold_col_weights(w1, width, ow1, 2, 1)       # (KH*W*C0,   OW1*C1)
    b2 = _fold_col_weights(w2, ow1, ow2, 2, 1)         # (KH*OW1*C1, OW2*C2)

    # conv3 weight as (oh2, ow2*c2) rows, tiled over batch; plus 0/1 group-sum rows.
    w3m = jnp.transpose(w3[0].astype(jnp.float32), (1, 2, 0)).reshape(oh2, ow2 * c2)
    w3t = jnp.tile(w3m, (batch, 1))                    # (N*OH2, OW2*C2)
    gsum = jnp.asarray(np.kron(np.eye(batch, dtype=np.float32),
                               np.ones((1, oh2), np.float32)))  # (N, N*OH2)

    gm = gamma.reshape(1, c2).astype(jnp.float32)
    bt = beta.reshape(1, c2).astype(jnp.float32)

    width_cols = max(b1.shape[1], b2.shape[1], w3t.shape[1], gsum.shape[1], c2)

    def padw(a):
        a = jnp.asarray(a, jnp.float32)
        return jnp.pad(a, ((0, 0), (0, width_cols - a.shape[1])))

    packed = jnp.concatenate(
        [padw(b1), padw(b2), padw(gm), padw(bt), padw(w3t), padw(gsum)], axis=0)
    expected_rows = KH * width * c0 + KH * ow1 * c1 + 2 + batch * oh2 + batch
    assert packed.shape[0] == expected_rows
    return packed


# ------------------------------- forward ------------------------------------

def _full_spec(shape):
    return pl.BlockSpec(shape, lambda: (0,) * len(shape))


def discriminator_forward(x_nchw, packed, *, feature_map_size):
    n, c0, h, w = x_nchw.shape
    c1, c2 = feature_map_size, 2 * feature_map_size
    oh1, ow1 = _conv_out(h, 4, 2, 1), _conv_out(w, 4, 2, 1)
    oh2, ow2 = _conv_out(oh1, 4, 2, 1), _conv_out(ow1, 4, 2, 1)
    d = Dims(n=n, c0=c0, h=h, w=w, c1=c1, oh1=oh1, ow1=ow1, c2=c2, oh2=oh2, ow2=ow2)

    expected_rows = KH * w * c0 + KH * ow1 * c1 + 2 + n * oh2 + n
    assert packed.shape[0] == expected_rows, (packed.shape, expected_rows)

    # Only glue on the activation path: one fused transpose+pad+reshape of the
    # raw NCHW input into the padded (rows=(n, h_pad), cols=(w, c)) GEMM layout.
    x_t = jnp.transpose(x_nchw, (0, 2, 3, 1)).astype(jnp.float32)     # (N,H,W,C0)
    xpad = jnp.pad(x_t, ((0, 0), (1, 1), (0, 0), (0, 0))).reshape(n * (h + 2), w * c0)

    # Advisory cost estimate for the XLA scheduler around the fused call.
    macs = (n * oh1 * (KH * w * c0) * (ow1 * c1)
            + n * oh2 * (KH * ow1 * c1) * (ow2 * c2)
            + n * (n * oh2) * (ow2 * c2))
    flops = 2 * macs + 12 * n * oh2 * ow2 * c2 + 4 * n * oh1 * ow1 * c1
    bytes_accessed = 4 * (xpad.size + packed.size + n)

    out = pl.pallas_call(
        functools.partial(_disc_kernel, d=d),
        out_shape=jax.ShapeDtypeStruct((n, 1), jnp.float32),
        in_specs=[_full_spec(xpad.shape), _full_spec(packed.shape)],
        out_specs=_full_spec((n, 1)),
        scratch_shapes=[pltpu.VMEM((n * (oh1 + 2), ow1 * c1), jnp.float32)],
        cost_estimate=pl.CostEstimate(flops=flops,
                                      transcendentals=n + c2,
                                      bytes_accessed=bytes_accessed),
    )(xpad, packed)
    # .view(-1, 1).squeeze(1)
    return out.reshape(-1)


# ------------------------------ reference -----------------------------------

def reference_forward(x_nchw, params):
    w1, w2, w3, gamma, beta = params

    def conv(x, w, stride, pad):
        return lax.conv_general_dilated(
            x, w, (stride, stride), [(pad, pad), (pad, pad)],
            dimension_numbers=("NCHW", "OIHW", "NCHW"))

    y = conv(x_nchw, w1, 2, 1)
    y = jnp.where(y > 0, y, 0.2 * y)
    y = conv(y, w2, 2, 1)
    mean = jnp.mean(y, axis=(0, 2, 3), keepdims=True)
    var = jnp.mean((y - mean) ** 2, axis=(0, 2, 3), keepdims=True)
    y = (y - mean) * lax.rsqrt(var + 1e-5)
    y = y * gamma.reshape(1, -1, 1, 1) + beta.reshape(1, -1, 1, 1)
    y = jnp.where(y > 0, y, 0.2 * y)
    y = conv(y, w3, 1, 0)
    y = 1.0 / (1.0 + jnp.exp(-y))
    return y.reshape(-1)


# --------------------------------- main --------------------------------------

if __name__ == "__main__":
    # Small shapes consistent with the module: batch=2, img_channels=4,
    # spatial 16x16, feature_map_size=8.
    batch, img_channels, hw, fm = 2, 4, 16, 8

    key = jax.random.PRNGKey(0)
    kx, k1, k2, k3, kg, kb = jax.random.split(key, 6)

    x = jax.random.normal(kx, (batch, img_channels, hw, hw), dtype=jnp.float32)

    # Deterministic synthetic parameters (DCGAN-style scale ~0.02).
    w1 = 0.02 * jax.random.normal(k1, (fm, img_channels, 4, 4), jnp.float32)
    w2 = 0.02 * jax.random.normal(k2, (2 * fm, fm, 4, 4), jnp.float32)
    w3 = 0.02 * jax.random.normal(k3, (1, 2 * fm, 4, 4), jnp.float32)
    gamma = 1.0 + 0.1 * jax.random.normal(kg, (2 * fm,), jnp.float32)
    beta = 0.1 * jax.random.normal(kb, (2 * fm,), jnp.float32)
    params = (w1, w2, w3, gamma, beta)

    # Weight folding / constant packing hoisted out of the jitted forward.
    packed = prepare_params(params, batch, hw, hw)
    fwd = jax.jit(functools.partial(discriminator_forward, feature_map_size=fm))

    out = jax.block_until_ready(fwd(x, packed))
    ref = jax.block_until_ready(reference_forward(x, params))

    assert out.shape == (batch,), out.shape
    assert jnp.allclose(out, ref, rtol=1e-4, atol=1e-5), (out, ref)
    print("KERNEL_OK")
</pallas_src>

<mosaic_0001>
module attributes {stable_mosaic.version = 11 : i64} {
  func.func @_disc_kernel(%arg0: memref<36x64xf32, #tpu.memory_space<vmem>>, %arg1: memref<524x64xf32, #tpu.memory_space<vmem>>, %arg2: memref<2x1xf32, #tpu.memory_space<vmem>>, %arg3: memref<20x64xf32, #tpu.memory_space<vmem>>) attributes {dimension_semantics = [], scalar_prefetch = 0 : i64, scratch_operands = 1 : i64, tpu.core_type = #tpu.core_type<tc>} {
    %c0 = arith.constant 0 : index
    %c0_0 = arith.constant 0 : index
    %0 = vector.load %arg1[%c0, %c0_0] : memref<524x64xf32, #tpu.memory_space<vmem>>, vector<256x64xf32>
    %c256 = arith.constant 256 : index
    %c0_1 = arith.constant 0 : index
    %1 = vector.load %arg1[%c256, %c0_1] : memref<524x64xf32, #tpu.memory_space<vmem>>, vector<256x64xf32>
    %c0_2 = arith.constant 0 : index
    %c0_3 = arith.constant 0 : index
    %2 = tpu.strided_load %arg0[%c0_2, %c0_3] {strides = array<i32: 2, 1>} : memref<36x64xf32, #tpu.memory_space<vmem>>, vector<8x64xf32>
    %c1 = arith.constant 1 : index
    %c0_4 = arith.constant 0 : index
    %3 = tpu.strided_load %arg0[%c1, %c0_4] {strides = array<i32: 2, 1>} : memref<36x64xf32, #tpu.memory_space<vmem>>, vector<8x64xf32>
    %c2 = arith.constant 2 : index
    %c0_5 = arith.constant 0 : index
    %4 = tpu.strided_load %arg0[%c2, %c0_5] {strides = array<i32: 2, 1>} : memref<36x64xf32, #tpu.memory_space<vmem>>, vector<8x64xf32>
    %c3 = arith.constant 3 : index
    %c0_6 = arith.constant 0 : index
    %5 = tpu.strided_load %arg0[%c3, %c0_6] {strides = array<i32: 2, 1>} : memref<36x64xf32, #tpu.memory_space<vmem>>, vector<8x64xf32>
    %6 = tpu.concatenate %2, %3, %4, %5 in 1 : vector<8x64xf32>, vector<8x64xf32>, vector<8x64xf32>, vector<8x64xf32> -> vector<8x256xf32>
    %c18 = arith.constant 18 : index
    %c0_7 = arith.constant 0 : index
    %7 = tpu.strided_load %arg0[%c18, %c0_7] {strides = array<i32: 2, 1>} : memref<36x64xf32, #tpu.memory_space<vmem>>, vector<8x64xf32>
    %c19 = arith.constant 19 : index
    %c0_8 = arith.constant 0 : index
    %8 = tpu.strided_load %arg0[%c19, %c0_8] {strides = array<i32: 2, 1>} : memref<36x64xf32, #tpu.memory_space<vmem>>, vector<8x64xf32>
    %c20 = arith.constant 20 : index
    %c0_9 = arith.constant 0 : index
    %9 = tpu.strided_load %arg0[%c20, %c0_9] {strides = array<i32: 2, 1>} : memref<36x64xf32, #tpu.memory_space<vmem>>, vector<8x64xf32>
    %c21 = arith.constant 21 : index
    %c0_10 = arith.constant 0 : index
    %10 = tpu.strided_load %arg0[%c21, %c0_10] {strides = array<i32: 2, 1>} : memref<36x64xf32, #tpu.memory_space<vmem>>, vector<8x64xf32>
    %11 = tpu.concatenate %7, %8, %9, %10 in 1 : vector<8x64xf32>, vector<8x64xf32>, vector<8x64xf32>, vector<8x64xf32> -> vector<8x256xf32>
    %12 = tpu.concatenate %6, %11 in 0 : vector<8x256xf32>, vector<8x256xf32> -> vector<16x256xf32>
    %cst = arith.constant dense<0.000000e+00> : vector<16x64xf32>
    %13 = tpu.matmul %12, %0, %cst {dimension_numbers = #tpu.dot_dimension_numbers<[1], [0], [0], [1], [0, 0, 1, 1], [], []>} : vector<16x256xf32>, vector<256x64xf32>, vector<16x64xf32> -> vector<16x64xf32>
    %cst_11 = arith.constant 0.000000e+00 : f32
    %14 = vector.broadcast %cst_11 : f32 to vector<16x64xf32>
    %15 = arith.cmpf ogt, %13, %14 : vector<16x64xf32>
    %cst_12 = arith.constant 2.000000e-01 : f32
    %16 = vector.broadcast %cst_12 : f32 to vector<16x64xf32>
    %17 = arith.mulf %16, %13 : vector<16x64xf32>
    %18 = arith.select %15, %13, %17 : vector<16x64xi1>, vector<16x64xf32>
    %cst_13 = arith.constant 0.000000e+00 : f32
    %19 = vector.broadcast %cst_13 : f32 to vector<20x64xf32>
    %c0_14 = arith.constant 0 : index
    %c0_15 = arith.constant 0 : index
    %20 = vector.load %arg3[%c0_14, %c0_15] : memref<20x64xf32, #tpu.memory_space<vmem>>, vector<20x64xf32>
    tpu.vector_store %arg3[%c0_14, %c0_15], %19 {strides = array<i32>} : memref<20x64xf32, #tpu.memory_space<vmem>>, vector<20x64xf32>,
    %21 = vector.extract_strided_slice %18 {offsets = [0, 0], sizes = [8, 64], strides = [1, 1]} : vector<16x64xf32> to vector<8x64xf32>
    %c1_16 = arith.constant 1 : index
    %c0_17 = arith.constant 0 : index
    %22 = vector.load %arg3[%c1_16, %c0_17] : memref<20x64xf32, #tpu.memory_space<vmem>>, vector<8x64xf32>
    tpu.vector_store %arg3[%c1_16, %c0_17], %21 {strides = array<i32>} : memref<20x64xf32, #tpu.memory_space<vmem>>, vector<8x64xf32>,
    %23 = vector.extract_strided_slice %18 {offsets = [8, 0], sizes = [8, 64], strides = [1, 1]} : vector<16x64xf32> to vector<8x64xf32>
    %c11 = arith.constant 11 : index
    %c0_18 = arith.constant 0 : index
    %24 = vector.load %arg3[%c11, %c0_18] : memref<20x64xf32, #tpu.memory_space<vmem>>, vector<8x64xf32>
    tpu.vector_store %arg3[%c11, %c0_18], %23 {strides = array<i32>} : memref<20x64xf32, #tpu.memory_space<vmem>>, vector<8x64xf32>,
    %c0_19 = arith.constant 0 : index
    %c0_20 = arith.constant 0 : index
    %25 = tpu.strided_load %arg3[%c0_19, %c0_20] {strides = array<i32: 2, 1>} : memref<20x64xf32, #tpu.memory_space<vmem>>, vector<4x64xf32>
    %c1_21 = arith.constant 1 : index
    %c0_22 = arith.constant 0 : index
    %26 = tpu.strided_load %arg3[%c1_21, %c0_22] {strides = array<i32: 2, 1>} : memref<20x64xf32, #tpu.memory_space<vmem>>, vector<4x64xf32>
    %c2_23 = arith.constant 2 : index
    %c0_24 = arith.constant 0 : index
    %27 = tpu.strided_load %arg3[%c2_23, %c0_24] {strides = array<i32: 2, 1>} : memref<20x64xf32, #tpu.memory_space<vmem>>, vector<4x64xf32>
    %c3_25 = arith.constant 3 : index
    %c0_26 = arith.constant 0 : index
    %28 = tpu.strided_load %arg3[%c3_25, %c0_26] {strides = array<i32: 2, 1>} : memref<20x64xf32, #tpu.memory_space<vmem>>, vector<4x64xf32>
    %29 = tpu.concatenate %25, %26, %27, %28 in 1 : vector<4x64xf32>, vector<4x64xf32>, vector<4x64xf32>, vector<4x64xf32> -> vector<4x256xf32>
    %c10 = arith.constant 10 : index
    %c0_27 = arith.constant 0 : index
    %30 = tpu.strided_load %arg3[%c10, %c0_27] {strides = array<i32: 2, 1>} : memref<20x64xf32, #tpu.memory_space<vmem>>, vector<4x64xf32>
    %c11_28 = arith.constant 11 : index
    %c0_29 = arith.constant 0 : index
    %31 = tpu.strided_load %arg3[%c11_28, %c0_29] {strides = array<i32: 2, 1>} : memref<20x64xf32, #tpu.memory_space<vmem>>, vector<4x64xf32>
    %c12 = arith.constant 12 : index
    %c0_30 = arith.constant 0 : index
    %32 = tpu.strided_load %arg3[%c12, %c0_30] {strides = array<i32: 2, 1>} : memref<20x64xf32, #tpu.memory_space<vmem>>, vector<4x64xf32>
    %c13 = arith.constant 13 : index
    %c0_31 = arith.constant 0 : index
    %33 = tpu.strided_load %arg3[%c13, %c0_31] {strides = array<i32: 2, 1>} : memref<20x64xf32, #tpu.memory_space<vmem>>, vector<4x64xf32>
    %34 = tpu.concatenate %30, %31, %32, %33 in 1 : vector<4x64xf32>, vector<4x64xf32>, vector<4x64xf32>, vector<4x64xf32> -> vector<4x256xf32>
    %35 = tpu.concatenate %29, %34 in 0 : vector<4x256xf32>, vector<4x256xf32> -> vector<8x256xf32>
    %cst_32 = arith.constant dense<0.000000e+00> : vector<8x64xf32>
    %36 = tpu.matmul %35, %1, %cst_32 {dimension_numbers = #tpu.dot_dimension_numbers<[1], [0], [0], [1], [0, 0, 1, 1], [], []>} : vector<8x256xf32>, vector<256x64xf32>, vector<8x64xf32> -> vector<8x64xf32>
    %cst_33 = arith.constant dense<0.000000e+00> : vector<64xf32>
    %37 = vector.multi_reduction <add>, %36, %cst_33 [0] : vector<8x64xf32> to vector<64xf32>
    %38 = vector.shape_cast %37 : vector<64xf32> to vector<1x64xf32>
    %39 = vector.extract_strided_slice %38 {offsets = [0, 0], sizes = [1, 16], strides = [1, 1]} : vector<1x64xf32> to vector<1x16xf32>
    %40 = vector.extract_strided_slice %38 {offsets = [0, 16], sizes = [1, 16], strides = [1, 1]} : vector<1x64xf32> to vector<1x16xf32>
    %41 = arith.addf %39, %40 : vector<1x16xf32>
    %42 = vector.extract_strided_slice %38 {offsets = [0, 32], sizes = [1, 16], strides = [1, 1]} : vector<1x64xf32> to vector<1x16xf32>
    %43 = arith.addf %41, %42 : vector<1x16xf32>
    %44 = vector.extract_strided_slice %38 {offsets = [0, 48], sizes = [1, 16], strides = [1, 1]} : vector<1x64xf32> to vector<1x16xf32>
    %45 = arith.addf %43, %44 : vector<1x16xf32>
    %cst_34 = arith.constant 3.125000e-02 : f32
    %46 = vector.broadcast %cst_34 : f32 to vector<1x16xf32>
    %47 = arith.mulf %45, %46 : vector<1x16xf32>
    %48 = tpu.concatenate %47, %47, %47, %47 in 1 : vector<1x16xf32>, vector<1x16xf32>, vector<1x16xf32>, vector<1x16xf32> -> vector<1x64xf32>
    %49 = vector.broadcast %48 : vector<1x64xf32> to vector<8x64xf32>
    %50 = arith.subf %36, %49 : vector<8x64xf32>
    %51 = arith.mulf %50, %50 : vector<8x64xf32>
    %cst_35 = arith.constant dense<0.000000e+00> : vector<64xf32>
    %52 = vector.multi_reduction <add>, %51, %cst_35 [0] : vector<8x64xf32> to vector<64xf32>
    %53 = vector.shape_cast %52 : vector<64xf32> to vector<1x64xf32>
    %54 = vector.extract_strided_slice %53 {offsets = [0, 0], sizes = [1, 16], strides = [1, 1]} : vector<1x64xf32> to vector<1x16xf32>
    %55 = vector.extract_strided_slice %53 {offsets = [0, 16], sizes = [1, 16], strides = [1, 1]} : vector<1x64xf32> to vector<1x16xf32>
    %56 = arith.addf %54, %55 : vector<1x16xf32>
    %57 = vector.extract_strided_slice %53 {offsets = [0, 32], sizes = [1, 16], strides = [1, 1]} : vector<1x64xf32> to vector<1x16xf32>
    %58 = arith.addf %56, %57 : vector<1x16xf32>
    %59 = vector.extract_strided_slice %53 {offsets = [0, 48], sizes = [1, 16], strides = [1, 1]} : vector<1x64xf32> to vector<1x16xf32>
    %60 = arith.addf %58, %59 : vector<1x16xf32>
    %cst_36 = arith.constant 3.125000e-02 : f32
    %61 = vector.broadcast %cst_36 : f32 to vector<1x16xf32>
    %62 = arith.mulf %60, %61 : vector<1x16xf32>
    %c512 = arith.constant 512 : index
    %c0_37 = arith.constant 0 : index
    %63 = vector.load %arg1[%c512, %c0_37] : memref<524x64xf32, #tpu.memory_space<vmem>>, vector<1x16xf32>
    %c513 = arith.constant 513 : index
    %c0_38 = arith.constant 0 : index
    %64 = vector.load %arg1[%c513, %c0_38] : memref<524x64xf32, #tpu.memory_space<vmem>>, vector<1x16xf32>
    %cst_39 = arith.constant 9.99999974E-6 : f32
    %65 = vector.broadcast %cst_39 : f32 to vector<1x16xf32>
    %66 = arith.addf %62, %65 : vector<1x16xf32>
    %67 = math.rsqrt %66 : vector<1x16xf32>
    %68 = arith.mulf %63, %67 : vector<1x16xf32>
    %69 = tpu.concatenate %68, %68, %68, %68 in 1 : vector<1x16xf32>, vector<1x16xf32>, vector<1x16xf32>, vector<1x16xf32> -> vector<1x64xf32>
    %70 = tpu.concatenate %64, %64, %64, %64 in 1 : vector<1x16xf32>, vector<1x16xf32>, vector<1x16xf32>, vector<1x16xf32> -> vector<1x64xf32>
    %71 = vector.broadcast %69 : vector<1x64xf32> to vector<8x64xf32>
    %72 = arith.mulf %50, %71 : vector<8x64xf32>
    %73 = vector.broadcast %70 : vector<1x64xf32> to vector<8x64xf32>
    %74 = arith.addf %72, %73 : vector<8x64xf32>
    %cst_40 = arith.constant 0.000000e+00 : f32
    %75 = vector.broadcast %cst_40 : f32 to vector<8x64xf32>
    %76 = arith.cmpf ogt, %74, %75 : vector<8x64xf32>
    %cst_41 = arith.constant 2.000000e-01 : f32
    %77 = vector.broadcast %cst_41 : f32 to vector<8x64xf32>
    %78 = arith.mulf %77, %74 : vector<8x64xf32>
    %79 = arith.select %76, %74, %78 : vector<8x64xi1>, vector<8x64xf32>
    %c514 = arith.constant 514 : index
    %c0_42 = arith.constant 0 : index
    %80 = vector.load %arg1[%c514, %c0_42] : memref<524x64xf32, #tpu.memory_space<vmem>>, vector<8x64xf32>
    %c522 = arith.constant 522 : index
    %c0_43 = arith.constant 0 : index
    %81 = vector.load %arg1[%c522, %c0_43] : memref<524x64xf32, #tpu.memory_space<vmem>>, vector<2x8xf32>
    %82 = arith.mulf %79, %80 : vector<8x64xf32>
    %cst_44 = arith.constant dense<0.000000e+00> : vector<2x64xf32>
    %83 = tpu.matmul %81, %82, %cst_44 {dimension_numbers = #tpu.dot_dimension_numbers<[1], [0], [0], [1], [0, 0, 1, 1], [], []>} : vector<2x8xf32>, vector<8x64xf32>, vector<2x64xf32> -> vector<2x64xf32>
    %cst_45 = arith.constant dense<0.000000e+00> : vector<2xf32>
    %84 = vector.multi_reduction <add>, %83, %cst_45 [1] : vector<2x64xf32> to vector<2xf32>
    %85 = vector.shape_cast %84 : vector<2xf32> to vector<2x1xf32>
    %cst_46 = arith.constant 0.000000e+00 : f32
    %86 = vector.broadcast %cst_46 : f32 to vector<2x1xf32>
    %87 = arith.subf %86, %85 : vector<2x1xf32>
    %88 = math.exp %87 : vector<2x1xf32>
    %cst_47 = arith.constant 1.000000e+00 : f32
    %89 = vector.broadcast %cst_47 : f32 to vector<2x1xf32>
    %90 = arith.addf %89, %88 : vector<2x1xf32>
    %91 = tpu.reciprocal %90 : vector<2x1xf32> -> vector<2x1xf32>
    %c0_48 = arith.constant 0 : index
    %c0_49 = arith.constant 0 : index
    %92 = vector.load %arg2[%c0_48, %c0_49] : memref<2x1xf32, #tpu.memory_space<vmem>>, vector<2x1xf32>
    tpu.vector_store %arg2[%c0_48, %c0_49], %91 {strides = array<i32>} : memref<2x1xf32, #tpu.memory_space<vmem>>, vector<2x1xf32>,
    return
  }
}

</mosaic_0001>

<llo_original>
// kernel: discriminator_forward.1
$region0: #{discriminator_forward.1}
  #allocation0 [shape = 'u32[]', space=smem, size = 0x4, offset = 0x4, fixed_abs, tag = 'smem constant byte address 0x4 - core index']
  #allocation1 [shape = 'u32[72,128]{1,0:T(1,128)}', space=vmem, size = 0x9000, scoped, tag = 'internal scratch']
  #allocation2 [shape = 'f32[20,64]{1,0:T(8,128)}', space=vmem, size = 0x3000, scoped, tag = 'scratch operand']
  %s0 = inlined_call_operand.vmem [shape: f32[36,64], index: 0, kind: input, shape index: {}]
  %s1 = inlined_call_operand.vmem [shape: f32[524,64], index: 1, kind: input, shape index: {}]
  %s2 = inlined_call_operand.vmem [shape: f32[2,1], index: 2, kind: output, shape index: {}]
  %s3 = sld [smem:[#allocation0]]
  $region18: #{discriminator_forward.1} parent=0
    _
  %s5 = ssub.s32 1, %s3
  %s6 = scalar_select 0, %s5, %s3
  // Predicated region
  $region2: #{discriminator_forward.1} parent=0 // pred_check
    _
  $region3: #{discriminator_forward.1} parent=0 // pred_check_branch
    %8 = sbr.rel (0) target = $region5
  $region4: #{discriminator_forward.1} parent=0 // pred_region
    _
  $region5: #{discriminator_forward.1} parent=0 // pred_fallthru
    _
  // Predicated region
  $region6: #{discriminator_forward.1} parent=0 // pred_check
    _
  $region7: #{discriminator_forward.1} parent=0 // pred_check_branch
    %10 = sbr.rel (0) target = $region9
  $region8: #{discriminator_forward.1} parent=0 // pred_region
    _
  $region9: #{discriminator_forward.1} parent=0 // pred_fallthru
    _
  %v11 = vld [vmem:[%s1] sm:$0xff]
  %v12 = vld [vmem:[%s1 + $0x8] sm:$0xff]
  %v13 = vld [vmem:[%s1 + $0x10] sm:$0xff]
  %v14 = vld [vmem:[%s1 + $0x18] sm:$0xff]
  %v15 = vld [vmem:[%s1 + $0x20] sm:$0xff]
  %v16 = vld [vmem:[%s1 + $0x28] sm:$0xff]
  %v17 = vld [vmem:[%s1 + $0x30] sm:$0xff]
  %v18 = vld [vmem:[%s1 + $0x38] sm:$0xff]
  %v19 = vld [vmem:[%s1 + $0x40] sm:$0xff]
  %v20 = vld [vmem:[%s1 + $0x48] sm:$0xff]
  %v21 = vld [vmem:[%s1 + $0x50] sm:$0xff]
  %v22 = vld [vmem:[%s1 + $0x58] sm:$0xff]
  %v23 = vld [vmem:[%s1 + $0x60] sm:$0xff]
  %v24 = vld [vmem:[%s1 + $0x68] sm:$0xff]
  %v25 = vld [vmem:[%s1 + $0x70] sm:$0xff]
  %v26 = vld [vmem:[%s1 + $0x78] sm:$0xff]
  %v27 = vld [vmem:[%s1 + $0x80] sm:$0xff]
  %v28 = vld [vmem:[%s1 + $0x88] sm:$0xff]
  %v29 = vld [vmem:[%s1 + $0x90] sm:$0xff]
  %v30 = vld [vmem:[%s1 + $0x98] sm:$0xff]
  %v31 = vld [vmem:[%s1 + $0xa0] sm:$0xff]
  %v32 = vld [vmem:[%s1 + $0xa8] sm:$0xff]
  %v33 = vld [vmem:[%s1 + $0xb0] sm:$0xff]
  %v34 = vld [vmem:[%s1 + $0xb8] sm:$0xff]
  %v35 = vld [vmem:[%s1 + $0xc0] sm:$0xff]
  %v36 = vld [vmem:[%s1 + $0xc8] sm:$0xff]
  %v37 = vld [vmem:[%s1 + $0xd0] sm:$0xff]
  %v38 = vld [vmem:[%s1 + $0xd8] sm:$0xff]
  %v39 = vld [vmem:[%s1 + $0xe0] sm:$0xff]
  %v40 = vld [vmem:[%s1 + $0xe8] sm:$0xff]
  %v41 = vld [vmem:[%s1 + $0xf0] sm:$0xff]
  %v42 = vld [vmem:[%s1 + $0xf8] sm:$0xff]
  %v43 = vld [vmem:[%s1 + $0x100] sm:$0xff]
  %v44 = vld [vmem:[%s1 + $0x108] sm:$0xff]
  %v45 = vld [vmem:[%s1 + $0x110] sm:$0xff]
  %v46 = vld [vmem:[%s1 + $0x118] sm:$0xff]
  %v47 = vld [vmem:[%s1 + $0x120] sm:$0xff]
  %v48 = vld [vmem:[%s1 + $0x128] sm:$0xff]
  %v49 = vld [vmem:[%s1 + $0x130] sm:$0xff]
  %v50 = vld [vmem:[%s1 + $0x138] sm:$0xff]
  %v51 = vld [vmem:[%s1 + $0x140] sm:$0xff]
  %v52 = vld [vmem:[%s1 + $0x148] sm:$0xff]
  %v53 = vld [vmem:[%s1 + $0x150] sm:$0xff]
  %v54 = vld [vmem:[%s1 + $0x158] sm:$0xff]
  %v55 = vld [vmem:[%s1 + $0x160] sm:$0xff]
  %v56 = vld [vmem:[%s1 + $0x168] sm:$0xff]
  %v57 = vld [vmem:[%s1 + $0x170] sm:$0xff]
  %v58 = vld [vmem:[%s1 + $0x178] sm:$0xff]
  %v59 = vld [vmem:[%s1 + $0x180] sm:$0xff]
  %v60 = vld [vmem:[%s1 + $0x188] sm:$0xff]
  %v61 = vld [vmem:[%s1 + $0x190] sm:$0xff]
  %v62 = vld [vmem:[%s1 + $0x198] sm:$0xff]
  %v63 = vld [vmem:[%s1 + $0x1a0] sm:$0xff]
  %v64 = vld [vmem:[%s1 + $0x1a8] sm:$0xff]
  %v65 = vld [vmem:[%s1 + $0x1b0] sm:$0xff]
  %v66 = vld [vmem:[%s1 + $0x1b8] sm:$0xff]
  %v67 = vld [vmem:[%s1 + $0x1c0] sm:$0xff]
  %v68 = vld [vmem:[%s1 + $0x1c8] sm:$0xff]
  %v69 = vld [vmem:[%s1 + $0x1d0] sm:$0xff]
  %v70 = vld [vmem:[%s1 + $0x1d8] sm:$0xff]
  %v71 = vld [vmem:[%s1 + $0x1e0] sm:$0xff]
  %v72 = vld [vmem:[%s1 + $0x1e8] sm:$0xff]
  %v73 = vld [vmem:[%s1 + $0x1f0] sm:$0xff]
  %v74 = vld [vmem:[%s1 + $0x1f8] sm:$0xff]
  %v75 = vld [vmem:[%s0] ss:$2 sm:$0xff]
  %s76 = scalar_lea.vmem %s0, 1
  %v77 = vld [vmem:[%s76] ss:$2 sm:$0xff]
  %s78 = scalar_lea.vmem %s0, 2
  %v79 = vld [vmem:[%s78] ss:$2 sm:$0xff]
  %s80 = scalar_lea.vmem %s0, 3
  %v81 = vld [vmem:[%s80] ss:$2 sm:$0xff]
  %83 = vrot.lane.b32.xlu0 %v77, 64
  %v84 = vpop.permute.xlu0 %83
  %87 = vrot.lane.b32.xlu0 %v81, 64
  %v88 = vpop.permute.xlu0 %87
  %vm90 = vcmask 523264
  %v91 = vsel %vm90, %v75, %v84
  %v92 = vsel %vm90, %v79, %v88
  %s93 = scalar_lea.vmem %s0, 18
  %v94 = vld [vmem:[%s93] ss:$2 sm:$0xff]
  %s95 = scalar_lea.vmem %s0, 19
  %v96 = vld [vmem:[%s95] ss:$2 sm:$0xff]
  %s97 = scalar_lea.vmem %s0, 20
  %v98 = vld [vmem:[%s97] ss:$2 sm:$0xff]
  %s99 = scalar_lea.vmem %s0, 21
  %v100 = vld [vmem:[%s99] ss:$2 sm:$0xff]
  %102 = vrot.lane.b32.xlu0 %v96, 64
  %v103 = vpop.permute.xlu0 %102
  %106 = vrot.lane.b32.xlu0 %v100, 64
  %v107 = vpop.permute.xlu0 %106
  %v109 = vsel %vm90, %v94, %v103
  %v110 = vsel %vm90, %v98, %v107
  %111 = vmatpush.msra.mxu0 %v26
  %112 = vmatpush.msra.mxu0 %v25
  %113 = vmatpush.msra.mxu0 %v24
  %114 = vmatpush.msra.mxu0 %v23
  %115 = vmatpush.msra.mxu0 %v22
  %116 = vmatpush.msra.mxu0 %v21
  %117 = vmatpush.msra.mxu0 %v20
  %118 = vmatpush.msra.mxu0 %v19
  %119 = vmatpush.msra.mxu0 %v18
  %120 = vmatpush.msra.mxu0 %v17
  %121 = vmatpush.msra.mxu0 %v16
  %122 = vmatpush.msra.mxu0 %v15
  %123 = vmatpush.msra.mxu0 %v14
  %124 = vmatpush.msra.mxu0 %v13
  %125 = vmatpush.msra.mxu0 %v12
  %126 = vmatpush.msra.mxu0 %v11
  %127 = vmatmul.f32.gmra.mxu0 %v91
  %v128 = vpop.f32.mrf.mxu0
  %v129 = vadd.f32 0.0, %v128
  %130 = vmatmul.f32.gmra.mxu0 %v109
  %v131 = vpop.f32.mrf.mxu0
  %v132 = vadd.f32 0.0, %v131
  %133 = vdwg.mxu0
  %134 = vmatpush.msra.mxu0 %v42
  %135 = vmatpush.msra.mxu0 %v41
  %136 = vmatpush.msra.mxu0 %v40
  %137 = vmatpush.msra.mxu0 %v39
  %138 = vmatpush.msra.mxu0 %v38
  %139 = vmatpush.msra.mxu0 %v37
  %140 = vmatpush.msra.mxu0 %v36
  %141 = vmatpush.msra.mxu0 %v35
  %142 = vmatpush.msra.mxu0 %v34
  %143 = vmatpush.msra.mxu0 %v33
  %144 = vmatpush.msra.mxu0 %v32
  %145 = vmatpush.msra.mxu0 %v31
  %146 = vmatpush.msra.mxu0 %v30
  %147 = vmatpush.msra.mxu0 %v29
  %148 = vmatpush.msra.mxu0 %v28
  %149 = vmatpush.msra.mxu0 %v27
  %150 = vmatmul.f32.gmra.mxu0 %v92
  %v151 = vpop.f32.mrf.mxu0
  %v152 = vadd.f32 %v129, %v151
  %153 = vmatmul.f32.gmra.mxu0 %v110
  %v154 = vpop.f32.mrf.mxu0
  %v155 = vadd.f32 %v132, %v154
  %156 = vdwg.mxu0
  %vm157 = vcmp.gt.f32.partialorder %v152, 0.0
  %vm158 = vcmp.gt.f32.partialorder %v155, 0.0
  %v159 = vmul.f32 %v152, 0.2
  %v160 = vmul.f32 %v155, 0.2
  %v161 = vsel %vm157, %v152, %v159
  %v162 = vsel %vm158, %v155, %v160
  %163 = vst.msk [vmem:[#allocation2] sm:$0xff] %vm90, 0.0
  %164 = vst.msk [vmem:[#allocation2 + $0x8] sm:$0xff] %vm90, 0.0
  %vm165 = vcmask 519168
  %166 = vst.msk [vmem:[#allocation2 + $0x10] sm:$0xf] %vm165, 0.0
  %167 = vst.msk [vmem:[#allocation2 + $0x1] sm:$0xff] %vm90, %v161
  %168 = vst.msk [vmem:[#allocation2 + $0xb] sm:$0xff] %vm90, %v162
  %v169 = vld [vmem:[#allocation2] ss:$2 sm:$0xf]
  %s170 = scalar_lea.vmem [#allocation2], 1
  %v171 = vld [vmem:[%s170] ss:$2 sm:$0xf]
  %s172 = scalar_lea.vmem [#allocation2], 2
  %v173 = vld [vmem:[%s172] ss:$2 sm:$0xf]
  %s174 = scalar_lea.vmem [#allocation2], 3
  %v175 = vld [vmem:[%s174] ss:$2 sm:$0xf]
  %177 = vrot.lane.b32.xlu0 %v171, 64
  %v178 = vpop.permute.xlu0 %177
  %181 = vrot.lane.b32.xlu0 %v175, 64
  %v182 = vpop.permute.xlu0 %181
  %v184 = vsel %vm90, %v169, %v178
  %v185 = vsel %vm90, %v173, %v182
  %s186 = scalar_lea.vmem [#allocation2], 10
  %v187 = vld [vmem:[%s186] ss:$2 sm:$0xf]
  %s188 = scalar_lea.vmem [#allocation2], 11
  %v189 = vld [vmem:[%s188] ss:$2 sm:$0xf]
  %s190 = scalar_lea.vmem [#allocation2], 12
  %v191 = vld [vmem:[%s190] ss:$2 sm:$0xf]
  %s192 = scalar_lea.vmem [#allocation2], 13
  %v193 = vld [vmem:[%s192] ss:$2 sm:$0xf]
  %195 = vrot.lane.b32.xlu0 %v189, 64
  %v196 = vpop.permute.xlu0 %195
  %199 = vrot.lane.b32.xlu0 %v193, 64
  %v200 = vpop.permute.xlu0 %199
  %v202 = vsel %vm90, %v187, %v196
  %v203 = vsel %vm90, %v191, %v200
  %v206 = vrot.slane %v202, 4
  %v207 = vrot.slane %v203, 4
  %vm210 = vcmask 1043456
  %v211 = vsel %vm210, %v184, %v206
  %v212 = vsel %vm210, %v185, %v207
  %213 = vmatpush.msra.mxu0 %v58
  %214 = vmatpush.msra.mxu0 %v57
  %215 = vmatpush.msra.mxu0 %v56
  %216 = vmatpush.msra.mxu0 %v55
  %217 = vmatpush.msra.mxu0 %v54
  %218 = vmatpush.msra.mxu0 %v53
  %219 = vmatpush.msra.mxu0 %v52
  %220 = vmatpush.msra.mxu0 %v51
  %221 = vmatpush.msra.mxu0 %v50
  %222 = vmatpush.msra.mxu0 %v49
  %223 = vmatpush.msra.mxu0 %v48
  %224 = vmatpush.msra.mxu0 %v47
  %225 = vmatpush.msra.mxu0 %v46
  %226 = vmatpush.msra.mxu0 %v45
  %227 = vmatpush.msra.mxu0 %v44
  %228 = vmatpush.msra.mxu0 %v43
  %229 = vmatmul.f32.gmra.mxu0 %v211
  %v230 = vpop.f32.mrf.mxu0
  %v231 = vadd.f32 0.0, %v230
  %232 = vdwg.mxu0
  %233 = vmatpush.msra.mxu0 %v74
  %234 = vmatpush.msra.mxu0 %v73
  %235 = vmatpush.msra.mxu0 %v72
  %236 = vmatpush.msra.mxu0 %v71
  %237 = vmatpush.msra.mxu0 %v70
  %238 = vmatpush.msra.mxu0 %v69
  %239 = vmatpush.msra.mxu0 %v68
  %240 = vmatpush.msra.mxu0 %v67
  %241 = vmatpush.msra.mxu0 %v66
  %242 = vmatpush.msra.mxu0 %v65
  %243 = vmatpush.msra.mxu0 %v64
  %244 = vmatpush.msra.mxu0 %v63
  %245 = vmatpush.msra.mxu0 %v62
  %246 = vmatpush.msra.mxu0 %v61
  %247 = vmatpush.msra.mxu0 %v60
  %248 = vmatpush.msra.mxu0 %v59
  %249 = vmatmul.f32.gmra.mxu0 %v212
  %v250 = vpop.f32.mrf.mxu0
  %v251 = vadd.f32 %v231, %v250
  %252 = vdwg.mxu0
  %v253 = vsel %vm90, %v251, 0.0
  %v254 = vrot.slane %v253, 4
  %v255 = vadd.f32 %v253, %v254
  %v256 = vrot.slane %v255, 2
  %v257 = vadd.f32 %v255, %v256
  %v258 = vrot.slane %v257, 1
  %v259 = vadd.f32 %v257, %v258
  %261 = vrot.lane.b32.xlu0 %v259, 112
  %v262 = vpop.permute.xlu0 %261
  %v264 = vadd.f32 %v259, %v262
  %265 = vrot.lane.b32.xlu0 %v259, 96
  %v266 = vpop.permute.xlu0 %265
  %v268 = vadd.f32 %v264, %v266
  %269 = vrot.lane.b32.xlu0 %v259, 80
  %v270 = vpop.permute.xlu0 %269
  %v272 = vadd.f32 %v268, %v270
  %v273 = vmul.f32 %v272, 0.03125
  %275 = vrot.lane.b32.xlu0 %v273, 16
  %v276 = vpop.permute.xlu0 %275
  %278 = vrot.lane.b32.xlu0 %v273, 32
  %v279 = vpop.permute.xlu0 %278
  %281 = vrot.lane.b32.xlu0 %v273, 48
  %v282 = vpop.permute.xlu0 %281
  %vm284 = vcmask 130048
  %v285 = vsel %vm284, %v273, %v276
  %vm286 = vcmask 261120
  %v287 = vsel %vm286, %v285, %v279
  %vm288 = vcmask 392192
  %v289 = vsel %vm288, %v287, %v282
  %v290 = vperm.slane %v289, 0
  %v291 = vsub.f32 %v251, %v290
  %v292 = vmul.f32 %v291, %v291
  %v293 = vsel %vm90, %v292, 0.0
  %v294 = vrot.slane %v293, 4
  %v295 = vadd.f32 %v293, %v294
  %v296 = vrot.slane %v295, 2
  %v297 = vadd.f32 %v295, %v296
  %v298 = vrot.slane %v297, 1
  %v299 = vadd.f32 %v297, %v298
  %301 = vrot.lane.b32.xlu0 %v299, 112
  %v302 = vpop.permute.xlu0 %301
  %v304 = vadd.f32 %v299, %v302
  %305 = vrot.lane.b32.xlu0 %v299, 96
  %v306 = vpop.permute.xlu0 %305
  %v308 = vadd.f32 %v304, %v306
  %309 = vrot.lane.b32.xlu0 %v299, 80
  %v310 = vpop.permute.xlu0 %309
  %v312 = vadd.f32 %v308, %v310
  %v313 = vmul.f32 %v312, 0.03125
  %v314 = vld [vmem:[%s1 + $0x200] sm:$0x1]
  %v315 = vld [vmem:[%s1 + $0x201] sm:$0x1]
  %v316 = vadd.f32 %v313, 1e-05
  %v317 = vrsqrt.pop %v316
  %v318 = vmul.f32 %v317, %v316
  %v319 = vmul.f32 %v318, %v317
  %v320 = vmul.f32 0.5, %v319
  %v321 = vsub.f32 1.5, %v320
  %v322 = vmul.f32 %v317, %v321
  %vm323 = vweird.f32 %v316
  %vm324 = vweird.f32 %v317
  %vm325 = vmor %vm323, %vm324
  %v326 = vsel %vm325, %v317, %v322
  %v327 = vmul.f32 %v314, %v326
  %329 = vrot.lane.b32.xlu0 %v327, 16
  %v330 = vpop.permute.xlu0 %329
  %332 = vrot.lane.b32.xlu0 %v327, 32
  %v333 = vpop.permute.xlu0 %332
  %335 = vrot.lane.b32.xlu0 %v327, 48
  %v336 = vpop.permute.xlu0 %335
  %v338 = vsel %vm284, %v327, %v330
  %v339 = vsel %vm286, %v338, %v333
  %v340 = vsel %vm288, %v339, %v336
  %342 = vrot.lane.b32.xlu0 %v315, 16
  %v343 = vpop.permute.xlu0 %342
  %345 = vrot.lane.b32.xlu0 %v315, 32
  %v346 = vpop.permute.xlu0 %345
  %348 = vrot.lane.b32.xlu0 %v315, 48
  %v349 = vpop.permute.xlu0 %348
  %v351 = vsel %vm284, %v315, %v343
  %v352 = vsel %vm286, %v351, %v346
  %v353 = vsel %vm288, %v352, %v349
  %v354 = vperm.slane %v340, 0
  %v355 = vmul.f32 %v291, %v354
  %v356 = vperm.slane %v353, 0
  %v357 = vadd.f32 %v355, %v356
  %vm358 = vcmp.gt.f32.partialorder %v357, 0.0
  %v359 = vmul.f32 %v357, 0.2
  %v360 = vsel %vm358, %v357, %v359
  %v361 = vld [vmem:[%s1 + $0x202] sm:$0xff]
  %v362 = vld [vmem:[%s1 + $0x20a] sm:$0x3]
  %v363 = vmul.f32 %v360, %v361
  %vm364 = vcmask 64512
  %v366 = vsel %vm364, %v362, 0
  %368 = vmatpush.msra.mxu0 0.0
  %369 = vmatpush.msra.mxu0 0.0
  %370 = vmatpush.msra.mxu0 0.0
  %371 = vmatpush.msra.mxu0 0.0
  %372 = vmatpush.msra.mxu0 0.0
  %373 = vmatpush.msra.mxu0 0.0
  %374 = vmatpush.msra.mxu0 0.0
  %375 = vmatpush.msra.mxu0 0.0
  %376 = vmatpush.msra.mxu0 0.0
  %377 = vmatpush.msra.mxu0 0.0
  %378 = vmatpush.msra.mxu0 0.0
  %379 = vmatpush.msra.mxu0 0.0
  %380 = vmatpush.msra.mxu0 0.0
  %381 = vmatpush.msra.mxu0 0.0
  %382 = vmatpush.msra.mxu0 0.0
  %383 = vmatpush.msra.mxu0 %v363
  %384 = vmatmul.f32.gmra.mxu0 %v366
  %v385 = vpop.f32.mrf.mxu0
  %v386 = vadd.f32 0.0, %v385
  %387 = vdwg.mxu0
  %vm388 = vcmask 517120
  %v389 = vsel %vm388, %v386, 0.0
  %390 = vadd.xlane.f32.xlu0 %v389
  %v391 = vpop.xlane.xlu0 %390
  %v392 = vsub.f32 0.0, %v391
  %v393 = vmul.f32 %v392, 1.442695
  %v394 = vpow.pop %v393
  %v395 = vadd.f32 %v394, 1.0
  %v396 = vrcp.pop %v395
  %v397 = vmul.f32 %v395, %v396
  %v398 = vsub.f32 1.0, %v397
  %v399 = vmul.f32 %v396, %v398
  %v400 = vadd.f32 %v396, %v399
  %vm401 = vweird.f32 %v395
  %vm402 = vweird.f32 %v396
  %vm403 = vmor %vm401, %vm402
  %v404 = vsel %vm403, %v396, %v400
  %v405 = vand.u32 2147483647, %v395
  %vm406 = vcmp.eq.f32.partialorder %v405, 8.507059e+37
  %v407 = vand.u32 %v395, 2147483648
  %v408 = vor.u32 1.1754944e-38, %v407
  %v409 = vsel %vm406, %v408, %v404
  %vm410 = vcmask 1024
  %411 = vst.msk [vmem:[%s2] sm:$0x3] %vm410, %v409
  // Predicated region
  $region10: #{discriminator_forward.1} parent=0 // pred_check
    _
  $region11: #{discriminator_forward.1} parent=0 // pred_check_branch
    %413 = sbr.rel (0) target = $region13
  $region12: #{discriminator_forward.1} parent=0 // pred_region
    _
  $region13: #{discriminator_forward.1} parent=0 // pred_fallthru
    _
  // Predicated region
  $region14: #{discriminator_forward.1} parent=0 // pred_check
    _
  $region15: #{discriminator_forward.1} parent=0 // pred_check_branch
    %415 = sbr.rel (0) target = $region17
  $region16: #{discriminator_forward.1} parent=0 // pred_region
    _
  $region17: #{discriminator_forward.1} parent=0 // pred_fallthru
    _

</llo_original>
